<compile_context>
chip_gen: v5e
topology: v5e:2x2
jax: 0.10.0
libtpu: 0.0.40
codegen_flags: <defaults>
</compile_context>

<pallas_src>
import functools

import jax
import jax.numpy as jnp
from jax.experimental import pallas as pl
from jax.experimental.pallas import tpu as pltpu

_BN_EPS = 1e-5
# Scoped-VMEM budget: <= 48 MiB is safe on v7x (64 MiB physical) and leaves large
# headroom on v5e/v6e (128 MiB physical).
_VMEM_LIMIT = 48 * 1024 * 1024


def _round_up(v, m):
    return -(-v // m) * m


def _auto_spatial_tile(s_real, cin, cout, out_bytes, *,
                       vmem_limit=_VMEM_LIMIT, target_lanes=2048):
    """Multiple-of-128 spatial tile sized so the heavier (apply) pass's
    double-buffered blocks fit comfortably inside the scoped VMEM budget."""
    # Apply pass, per spatial lane: x block (bf16, Cin) + out block (Cout, out_bytes),
    # both double-buffered by the BlockSpec pipeline.
    per_lane = 2 * (cin * 2 + cout * out_bytes)
    resident = 2 * cout * cin * 2          # weight block (bf16), worst-case x2
    budget = int(vmem_limit * 0.6) - resident
    cap = max(128, (budget // per_lane) // 128 * 128)
    tile = min(cap, target_lanes, _round_up(max(s_real, 1), 128))
    return max(tile, 128)


def _stats_kernel(x_ref, w_ref, stat_ref):
    """Pass 1: per-batch partial (sum, sum-of-squares) of y = w @ x, accumulated
    across the spatial-tile axis into the batch-resident (2, Cout, 1) output."""
    @pl.when(pl.program_id(1) == 0)
    def _init():
        stat_ref[...] = jnp.zeros_like(stat_ref)

    # (Cout, Cin) @ (Cin, s_tile) on the MXU, f32 accumulation.
    y = jnp.dot(w_ref[...], x_ref[...], preferred_element_type=jnp.float32)
    stat_ref[0] = stat_ref[0] + jnp.sum(y, axis=1, keepdims=True)
    stat_ref[1] = stat_ref[1] + jnp.sum(y * y, axis=1, keepdims=True)


def _apply_kernel(x_ref, w_ref, ss_ref, o_ref):
    """Pass 2: recompute y for this tile and apply the folded per-channel affine."""
    y = jnp.dot(w_ref[...], x_ref[...], preferred_element_type=jnp.float32)
    o_ref[...] = (y * ss_ref[0] + ss_ref[1]).astype(o_ref.dtype)


def shortcut_forward(t, x, params, *, stride, in_planes, expansion, planes,
                     compute_dtype=jnp.bfloat16, out_dtype=None,
                     target_lanes=2048):
    """Pallas implementation of Shortcut.forward(t, x).  x is NCHW."""
    cout = expansion * planes
    if stride == 1 and in_planes == cout:
        return x  # nn.Sequential() identity branch

    n, c, h, w = x.shape
    assert c == in_planes
    out_dtype = x.dtype if out_dtype is None else out_dtype

    # 1x1 conv with stride s == strided spatial subsample + channel matmul (NCHW kept).
    xs = x[:, :, ::stride, ::stride]                      # (N, Cin, Ho, Wo)
    ho, wo = xs.shape[2], xs.shape[3]
    s_real = ho * wo

    out_bytes = jnp.dtype(out_dtype).itemsize
    s_tile = _auto_spatial_tile(s_real, c, cout, out_bytes,
                                target_lanes=target_lanes)
    s_pad = _round_up(s_real, s_tile)

    x_mat = xs.reshape(n, c, s_real).astype(compute_dtype)        # (N, Cin, S)
    if s_pad != s_real:
        # Zero columns contribute 0 to sum and sum-of-squares -> stats stay exact.
        x_mat = jnp.pad(x_mat, ((0, 0), (0, 0), (0, s_pad - s_real)))
    w_mat = params["conv1_w"][:, :, 0, 0].astype(compute_dtype)   # (Cout, Cin)

    grid = (n, s_pad // s_tile)
    x_spec = pl.BlockSpec((None, c, s_tile), lambda i, j: (i, 0, j))
    w_spec = pl.BlockSpec((cout, c), lambda i, j: (0, 0))

    # Pass 1: per-batch partial statistics (batch axis "parallel": both v7x TCs work).
    partial = pl.pallas_call(
        _stats_kernel,
        out_shape=jax.ShapeDtypeStruct((n, 2, cout, 1), jnp.float32),
        grid=grid,
        in_specs=[x_spec, w_spec],
        out_specs=pl.BlockSpec((None, 2, cout, 1), lambda i, j: (i, 0, 0, 0)),
        compiler_params=pltpu.CompilerParams(
            dimension_semantics=("parallel", "arbitrary"),
            vmem_limit_bytes=_VMEM_LIMIT),
    )(x_mat, w_mat)

    # Tiny O(N*Cout) reduction + gamma/beta fold in plain JAX (out of the hot kernels).
    count = float(n * s_real)
    sums = jnp.sum(partial[:, 0, :, 0], axis=0)                   # (Cout,)
    sqs = jnp.sum(partial[:, 1, :, 0], axis=0)                    # (Cout,)
    mean = sums / count
    var = jnp.maximum(sqs / count - mean * mean, 0.0)
    # TODO(synk): single-pass E[y^2]-E[y]^2 loses precision when |mean| >> std; switch
    # to a shifted / Chan-style per-batch merge if bit-accurate BN stats are required.
    gamma = params["bn_gamma"][t].astype(jnp.float32)
    beta = params["bn_beta"][t].astype(jnp.float32)
    scale = gamma * jax.lax.rsqrt(var + _BN_EPS)
    shift = beta - mean * scale
    scale_shift = jnp.stack([scale, shift], axis=0).reshape(2, cout, 1)

    # Pass 2: normalize (embarrassingly parallel; recompute y instead of storing it).
    out = pl.pallas_call(
        _apply_kernel,
        out_shape=jax.ShapeDtypeStruct((n, cout, s_pad), out_dtype),
        grid=grid,
        in_specs=[x_spec, w_spec,
                  pl.BlockSpec((2, cout, 1), lambda i, j: (0, 0, 0))],
        out_specs=pl.BlockSpec((None, cout, s_tile), lambda i, j: (i, 0, j)),
        compiler_params=pltpu.CompilerParams(
            dimension_semantics=("parallel", "parallel"),
            vmem_limit_bytes=_VMEM_LIMIT),
    )(x_mat, w_mat, scale_shift)

    return out[:, :, :s_real].reshape(n, cout, ho, wo)


def _reference_forward(t, x, params, *, stride, in_planes, expansion, planes,
                       compute_dtype=jnp.float32):
    """Pure-JAX reference (mirrors PyTorch conv1 + bn1[t] in train mode).
    compute_dtype emulates the kernel's operand quantization when set to bf16."""
    if stride == 1 and in_planes == expansion * planes:
        return x
    w_conv = params["conv1_w"][:, :, 0, 0].astype(compute_dtype).astype(jnp.float32)
    xs = x[:, :, ::stride, ::stride].astype(compute_dtype).astype(jnp.float32)
    y = jnp.einsum("oc,nchw->nohw", w_conv, xs)
    mean = jnp.mean(y, axis=(0, 2, 3), keepdims=True)
    var = jnp.mean((y - mean) ** 2, axis=(0, 2, 3), keepdims=True)
    gamma = params["bn_gamma"][t].reshape(1, -1, 1, 1)
    beta = params["bn_beta"][t].reshape(1, -1, 1, 1)
    return (y - mean) * jax.lax.rsqrt(var + _BN_EPS) * gamma + beta


def init_params(key, *, in_planes, expansion, planes, total_task):
    cout = expansion * planes
    k_w, k_g, k_b = jax.random.split(key, 3)
    fan_in = in_planes * 1 * 1
    bound = 1.0 / jnp.sqrt(fan_in)
    conv1_w = jax.random.uniform(
        k_w, (cout, in_planes, 1, 1), jnp.float32, -bound, bound)
    # BN default is gamma=1, beta=0; perturb per task so the task index matters.
    bn_gamma = 1.0 + 0.1 * jax.random.normal(k_g, (total_task, cout), jnp.float32)
    bn_beta = 0.1 * jax.random.normal(k_b, (total_task, cout), jnp.float32)
    return {"conv1_w": conv1_w, "bn_gamma": bn_gamma, "bn_beta": bn_beta}


if __name__ == "__main__":
    stride, in_planes, expansion, planes, total_task = 2, 4, 1, 8, 3
    t = 1

    key = jax.random.PRNGKey(0)
    k_x, k_p, k_x2, k_x3 = jax.random.split(key, 4)
    x = jax.random.normal(k_x, (2, in_planes, 16, 16), jnp.float32)
    params = init_params(k_p, in_planes=in_planes, expansion=expansion,
                         planes=planes, total_task=total_task)

    fwd = functools.partial(shortcut_forward, stride=stride, in_planes=in_planes,
                            expansion=expansion, planes=planes)
    reff = functools.partial(_reference_forward, stride=stride, in_planes=in_planes,
                             expansion=expansion, planes=planes)

    # Base case: S = 64 -> padded to a 128-lane tile (exercises zero-pad exactness).
    out = jax.block_until_ready(fwd(t, x, params))
    assert out.shape == (2, expansion * planes, 8, 8)

    # Tight check vs. a reference that uses the same bf16 operand quantization.
    ref_bf16 = reff(t, x, params, compute_dtype=jnp.bfloat16)
    assert jnp.allclose(out, ref_bf16, atol=1e-3, rtol=1e-3), "mismatch vs bf16-consistent ref"

    # Loose sanity check vs. the pure-f32 PyTorch-style reference (bf16 operands
    # introduce a small, bounded quantization error).
    ref_f32 = reff(t, x, params, compute_dtype=jnp.float32)
    assert jnp.allclose(out, ref_f32, atol=1e-1, rtol=5e-2), "mismatch vs f32 ref"

    # Multi-tile path: force 128-lane tiles so S=256 splits into 2 spatial tiles
    # (exercises cross-tile per-batch stats accumulation + the parallel batch axis).
    x2 = jax.random.normal(k_x2, (2, in_planes, 32, 32), jnp.float32)
    out2 = jax.block_until_ready(fwd(t, x2, params, target_lanes=128))
    ref2 = reff(t, x2, params, compute_dtype=jnp.bfloat16)
    assert out2.shape == (2, expansion * planes, 16, 16)
    assert jnp.allclose(out2, ref2, atol=1e-3, rtol=1e-3), "multi-tile stats mismatch"

    # Odd spatial size (7x7 = 49): padding with 79 zero columns must keep stats exact.
    x3 = jax.random.normal(k_x3, (2, in_planes, 14, 14), jnp.float32)
    out3 = jax.block_until_ready(fwd(t, x3, params))
    ref3 = reff(t, x3, params, compute_dtype=jnp.bfloat16)
    assert out3.shape == (2, expansion * planes, 7, 7)
    assert jnp.allclose(out3, ref3, atol=1e-3, rtol=1e-3), "padded-stats mismatch"

    # Optional bf16 output path (for consumers that accept it).
    out_b = jax.block_until_ready(fwd(t, x, params, out_dtype=jnp.bfloat16))
    assert out_b.dtype == jnp.bfloat16
    assert jnp.allclose(out_b.astype(jnp.float32), ref_bf16, atol=3e-2, rtol=3e-2)

    # Identity branch (stride=1, in_planes == expansion*planes).
    x_id = jax.random.normal(k_x, (2, 8, 16, 16), jnp.float32)
    out_id = shortcut_forward(t, x_id, params, stride=1, in_planes=8,
                              expansion=1, planes=8)
    assert jnp.array_equal(out_id, x_id)

    print("KERNEL_OK")
</pallas_src>

<mosaic_0001>
module attributes {stable_mosaic.version = 11 : i64} {
  func.func @_stats_kernel(%arg0: i32, %arg1: i32, %arg2: memref<1x4x128xbf16, #tpu.memory_space<vmem>>, %arg3: memref<8x4xbf16, #tpu.memory_space<vmem>>, %arg4: memref<1x2x8x1xf32, #tpu.memory_space<vmem>>) attributes {dimension_semantics = [#tpu.dimension_semantics<parallel>, #tpu.dimension_semantics<arbitrary>], iteration_bounds = array<i64: 2, 1>, scalar_prefetch = 0 : i64, scratch_operands = 0 : i64, tpu.core_type = #tpu.core_type<tc>, window_params = [{transform_indices = @transform_0, window_bounds = array<i64: 1, 4, 128>}, {pipeline_mode = #tpu.pipeline_mode<synchronous>, transform_indices = @transform_1, window_bounds = array<i64: 8, 4>}, {transform_indices = @transform_2, window_bounds = array<i64: 1, 2, 8, 1>}]} {
    %c0_i32 = arith.constant 0 : i32
    %0 = arith.cmpi eq, %arg1, %c0_i32 : i32
    %1 = arith.extui %0 : i1 to i32
    %c0_i32_0 = arith.constant 0 : i32
    %2 = arith.cmpi ne, %1, %c0_i32_0 : i32
    scf.if %2 {
      %cst_22 = arith.constant 0.000000e+00 : f32
      %24 = vector.broadcast %cst_22 : f32 to vector<2x8x1xf32>
      %c0_23 = arith.constant 0 : index
      %c0_24 = arith.constant 0 : index
      %c0_25 = arith.constant 0 : index
      %c0_26 = arith.constant 0 : index
      %25 = vector.load %arg4[%c0_23, %c0_24, %c0_25, %c0_26] : memref<1x2x8x1xf32, #tpu.memory_space<vmem>>, vector<1x2x8x1xf32>
      %26 = vector.shape_cast %25 : vector<1x2x8x1xf32> to vector<2x8x1xf32>
      %27 = vector.shape_cast %24 : vector<2x8x1xf32> to vector<1x2x8x1xf32>
      tpu.vector_store %arg4[%c0_23, %c0_24, %c0_25, %c0_26], %27 {strides = array<i32>} : memref<1x2x8x1xf32, #tpu.memory_space<vmem>>, vector<1x2x8x1xf32>,
    } else {
    }
    %c0 = arith.constant 0 : index
    %c0_1 = arith.constant 0 : index
    %3 = vector.load %arg3[%c0, %c0_1] : memref<8x4xbf16, #tpu.memory_space<vmem>>, vector<8x4xbf16>
    %c0_2 = arith.constant 0 : index
    %c0_3 = arith.constant 0 : index
    %c0_4 = arith.constant 0 : index
    %4 = vector.load %arg2[%c0_2, %c0_3, %c0_4] : memref<1x4x128xbf16, #tpu.memory_space<vmem>>, vector<1x4x128xbf16>
    %5 = vector.shape_cast %4 : vector<1x4x128xbf16> to vector<4x128xbf16>
    %cst = arith.constant dense<0.000000e+00> : vector<8x128xf32>
    %6 = tpu.matmul %3, %5, %cst {dimension_numbers = #tpu.dot_dimension_numbers<[1], [0], [0], [1], [0, 0, 1, 1], [], []>} : vector<8x4xbf16>, vector<4x128xbf16>, vector<8x128xf32> -> vector<8x128xf32>
    %c0_5 = arith.constant 0 : index
    %c0_6 = arith.constant 0 : index
    %c0_7 = arith.constant 0 : index
    %c0_8 = arith.constant 0 : index
    %7 = vector.load %arg4[%c0_5, %c0_6, %c0_7, %c0_8] : memref<1x2x8x1xf32, #tpu.memory_space<vmem>>, vector<1x1x8x1xf32>
    %8 = vector.shape_cast %7 : vector<1x1x8x1xf32> to vector<8x1xf32>
    %cst_9 = arith.constant dense<0.000000e+00> : vector<8xf32>
    %9 = vector.multi_reduction <add>, %6, %cst_9 [1] : vector<8x128xf32> to vector<8xf32>
    %10 = vector.shape_cast %9 : vector<8xf32> to vector<8x1xf32>
    %11 = arith.addf %8, %10 : vector<8x1xf32>
    %c0_10 = arith.constant 0 : index
    %c0_11 = arith.constant 0 : index
    %c0_12 = arith.constant 0 : index
    %c0_13 = arith.constant 0 : index
    %12 = vector.load %arg4[%c0_10, %c0_11, %c0_12, %c0_13] : memref<1x2x8x1xf32, #tpu.memory_space<vmem>>, vector<1x1x8x1xf32>
    %13 = vector.shape_cast %12 : vector<1x1x8x1xf32> to vector<8x1xf32>
    %14 = vector.shape_cast %11 : vector<8x1xf32> to vector<1x1x8x1xf32>
    tpu.vector_store %arg4[%c0_10, %c0_11, %c0_12, %c0_13], %14 {strides = array<i32>} : memref<1x2x8x1xf32, #tpu.memory_space<vmem>>, vector<1x1x8x1xf32>,
    %c0_14 = arith.constant 0 : index
    %c1 = arith.constant 1 : index
    %c0_15 = arith.constant 0 : index
    %c0_16 = arith.constant 0 : index
    %15 = vector.load %arg4[%c0_14, %c1, %c0_15, %c0_16] : memref<1x2x8x1xf32, #tpu.memory_space<vmem>>, vector<1x1x8x1xf32>
    %16 = vector.shape_cast %15 : vector<1x1x8x1xf32> to vector<8x1xf32>
    %17 = arith.mulf %6, %6 : vector<8x128xf32>
    %cst_17 = arith.constant dense<0.000000e+00> : vector<8xf32>
    %18 = vector.multi_reduction <add>, %17, %cst_17 [1] : vector<8x128xf32> to vector<8xf32>
    %19 = vector.shape_cast %18 : vector<8xf32> to vector<8x1xf32>
    %20 = arith.addf %16, %19 : vector<8x1xf32>
    %c0_18 = arith.constant 0 : index
    %c1_19 = arith.constant 1 : index
    %c0_20 = arith.constant 0 : index
    %c0_21 = arith.constant 0 : index
    %21 = vector.load %arg4[%c0_18, %c1_19, %c0_20, %c0_21] : memref<1x2x8x1xf32, #tpu.memory_space<vmem>>, vector<1x1x8x1xf32>
    %22 = vector.shape_cast %21 : vector<1x1x8x1xf32> to vector<8x1xf32>
    %23 = vector.shape_cast %20 : vector<8x1xf32> to vector<1x1x8x1xf32>
    tpu.vector_store %arg4[%c0_18, %c1_19, %c0_20, %c0_21], %23 {strides = array<i32>} : memref<1x2x8x1xf32, #tpu.memory_space<vmem>>, vector<1x1x8x1xf32>,
    return
  }
  func.func @transform_0(%arg0: i32, %arg1: i32) -> (i32, i32, i32) {
    %c0_i32 = arith.constant 0 : i32
    %c0_i32_0 = arith.constant 0 : i32
    return %arg0, %c0_i32, %arg1 : i32, i32, i32
  }
  func.func @transform_1(%arg0: i32, %arg1: i32) -> (i32, i32) {
    %c0_i32 = arith.constant 0 : i32
    %c0_i32_0 = arith.constant 0 : i32
    %c0_i32_1 = arith.constant 0 : i32
    return %c0_i32, %c0_i32_0 : i32, i32
  }
  func.func @transform_2(%arg0: i32, %arg1: i32) -> (i32, i32, i32, i32) {
    %c0_i32 = arith.constant 0 : i32
    %c0_i32_0 = arith.constant 0 : i32
    %c0_i32_1 = arith.constant 0 : i32
    %c0_i32_2 = arith.constant 0 : i32
    return %arg0, %c0_i32, %c0_i32_0, %c0_i32_1 : i32, i32, i32, i32
  }
}

</mosaic_0001>

<llo_original>
// kernel: tpu_custom_call.1
$region0: #{tpu_custom_call.1}
  #allocation0 [shape = 'u32[]', space=smem, size = 0x4, offset = 0x4, fixed_abs, tag = 'smem constant byte address 0x4 - core index']
  #allocation1 [shape = 'u32[72,128]{1,0:T(1,128)}', space=vmem, size = 0x9000, scoped, tag = 'internal scratch']
  %s0 = inlined_call_operand.vmem [shape: bf16[2,4,128], index: 0, kind: input, shape index: {}]
  %s1 = inlined_call_operand.vmem [shape: bf16[8,4], index: 1, kind: input, shape index: {}]
  %s2 = inlined_call_operand.vmem [shape: f32[2,2,8,1], index: 2, kind: output, shape index: {}]
  %s3 = sld [smem:[#allocation0]]
  $region45: #{tpu_custom_call.1} parent=0
    _
  %s5 = ssub.s32 1, %s3
  %s6 = scalar_select 0, %s5, %s3
  loop: start=0, step=1, limit=4
  $region2: #{tpu_custom_call.1} parent=0 // loop_pre_header
    _
  $region3: #{tpu_custom_call.1} parent=0 // loop_header
    %s8 = sphi 0, %s12
    %p9 = scmp.ge.s32.totalorder %s8, 4
    %s15 = sphi 0, %s27
    %s16 = sphi 0, %s23
    %s17 = sphi 0, %s15
    %s18 = sphi 0, %s16
    %s19 = sphi 0, %s17
    %s20 = sphi 0, %s18
    %s32 = sphi 0, %s34
    %s35 = sphi 0, %s32
    %s36 = sphi 0, %s35
    %s52 = sphi 0, %s36
    %s56 = sphi 0, %s56
    %s58 = sphi 0, %s56
    %s59 = sphi 0, %s58
    %s73 = sphi 0, %s59
    %s79 = sphi 0, %s81
    %s82 = sphi 0, %s79
    %s83 = sphi 0, %s82
    %s99 = sphi 0, %s83
  $region4: #{tpu_custom_call.1} parent=0 // loop_header_branch
    %11 = sbr.rel (%p9) target = $region8
  $region5: #{tpu_custom_call.1} parent=0 // loop_body
    %s13 = ssub.s32 %s8, 1
    %s14 = ssub.s32 %s8, 2
    %s21 = sadd.s32 1, %s16
    %p22 = scmp.ge.s32.totalorder %s21, 1
    %s23 = scalar_select %p22, 0, %s21
    %s24 = sadd.s32 1, %s15
    %s25 = scalar_select %p22, %s24, %s15
    %p26 = scmp.ge.s32.totalorder %s25, 2
    %s27 = scalar_select %p26, 0, %s25
    %s28 = ssub.s32 %s15, %s27
    %s29 = ssub.s32 %s16, %s23
    %s30 = sor.u32 %s28, %s29
    %p31 = scmp.eq.s32.totalorder %s30, 0
    %s33 = sadd.s32 %s32, 1
    %s34 = scalar_select %p31, %s32, %s33
    %p37 = pneg %p31
    %p38 = scmp.eq.s32.totalorder %s8, 1
    %p39 = por %p37, %p38
    %p40 = scmp.ne.s32.totalorder %s32, %s35
    %p41 = scmp.eq.s32.totalorder %s8, 0
    %p42 = por %p40, %p41
    %p43 = scmp.ne.s32.totalorder %s32, %s35
    %p44 = scmp.eq.s32.totalorder %s13, 1
    %p45 = por %p43, %p44
    %p46 = scmp.ne.s32.totalorder %s35, %s36
    %p47 = scmp.eq.s32.totalorder %s13, 0
    %p48 = por %p46, %p47
    %p49 = scmp.ne.s32.totalorder %s35, %s36
    %p50 = scmp.eq.s32.totalorder %s14, 1
    %p51 = por %p49, %p50
    %p53 = scmp.ne.s32.totalorder %s36, %s52
    %p54 = scmp.eq.s32.totalorder %s14, 0
    %p55 = por %p53, %p54
    %s57 = sadd.s32 %s56, 1
    %p60 = scmp.eq.s32.totalorder %s8, 1
    %p61 = scmp.ne.s32.totalorder %s56, %s58
    %p62 = scmp.eq.s32.totalorder %s8, 0
    %p63 = por %p61, %p62
    %p64 = scmp.ne.s32.totalorder %s56, %s58
    %p65 = scmp.eq.s32.totalorder %s13, 1
    %p66 = por %p64, %p65
    %p67 = scmp.ne.s32.totalorder %s58, %s59
    %p68 = scmp.eq.s32.totalorder %s13, 0
    %p69 = por %p67, %p68
    %p70 = scmp.ne.s32.totalorder %s58, %s59
    %p71 = scmp.eq.s32.totalorder %s14, 1
    %p72 = por %p70, %p71
    %p74 = scmp.ne.s32.totalorder %s59, %s73
    %p75 = scmp.eq.s32.totalorder %s14, 0
    %p76 = por %p74, %p75
    %s77 = ssub.s32 %s15, %s27
    %p78 = scmp.eq.s32.totalorder %s77, 0
    %s80 = sadd.s32 %s79, 1
    %s81 = scalar_select %p78, %s79, %s80
    %p84 = pneg %p78
    %p85 = scmp.eq.s32.totalorder %s8, 1
    %p86 = por %p84, %p85
    %p87 = scmp.ne.s32.totalorder %s79, %s82
    %p88 = scmp.eq.s32.totalorder %s8, 0
    %p89 = por %p87, %p88
    %p90 = scmp.ne.s32.totalorder %s79, %s82
    %p91 = scmp.eq.s32.totalorder %s13, 1
    %p92 = por %p90, %p91
    %p93 = scmp.ne.s32.totalorder %s82, %s83
    %p94 = scmp.eq.s32.totalorder %s13, 0
    %p95 = por %p93, %p94
    %p96 = scmp.ne.s32.totalorder %s82, %s83
    %p97 = scmp.eq.s32.totalorder %s14, 1
    %p98 = por %p96, %p97
    %p100 = scmp.ne.s32.totalorder %s83, %s99
    %p101 = scmp.eq.s32.totalorder %s14, 0
    %p102 = por %p100, %p101
    %p103 = scmp.le.s32.totalorder 1, %s8
    %p104 = scmp.lt.s32.totalorder %s8, 3
    %p105 = pnand %p103, %p104
    %p106 = pneg %p105
    // Predicated region
    $region9: #{tpu_custom_call.1} parent=5 // pred_check
      _
    $region10: #{tpu_custom_call.1} parent=5 // pred_check_branch
      %108 = sbr.rel (%p105) target = $region12
    $region11: #{tpu_custom_call.1} parent=5 // pred_region
      %s109 = ssub.s32 %s8, 1
      // Predicated region
      $region13: #{tpu_custom_call.1} parent=11 // pred_check
        %p110 = pneg %p69
      $region14: #{tpu_custom_call.1} parent=11 // pred_check_branch
        %112 = sbr.rel (%p110) target = $region16
      $region15: #{tpu_custom_call.1} parent=11 // pred_region
        _
      $region16: #{tpu_custom_call.1} parent=11 // pred_fallthru
        _
    $region12: #{tpu_custom_call.1} parent=5 // pred_fallthru
      _
    %p113 = scmp.lt.s32.totalorder %s8, 2
    // Predicated region
    $region17: #{tpu_custom_call.1} parent=5 // pred_check
      %p114 = pneg %p113
    $region18: #{tpu_custom_call.1} parent=5 // pred_check_branch
      %116 = sbr.rel (%p114) target = $region20
    $region19: #{tpu_custom_call.1} parent=5 // pred_region
      // Predicated region
      $region21: #{tpu_custom_call.1} parent=19 // pred_check
        %p117 = pneg %p42
      $region22: #{tpu_custom_call.1} parent=19 // pred_check_branch
        %119 = sbr.rel (%p117) target = $region24
      $region23: #{tpu_custom_call.1} parent=19 // pred_region
        %p120 = scmp.lt.s32.totalorder %s15, 1
        %s121 = scalar_select %p120, %s15, 1
        %p122 = scmp.lt.s32.totalorder %s16, 0
        %s123 = scalar_select %p122, %s16, 0
        %s124 = sadd.s32 %s123, %s121
        %s125 = smul.addr %s124, 2
        %s126 = scalar_lea.vmem %s0, %s125
      $region24: #{tpu_custom_call.1} parent=19 // pred_fallthru
        _
    $region20: #{tpu_custom_call.1} parent=5 // pred_fallthru
      _
    %p127 = scmp.le.s32.totalorder 1, %s8
    %p128 = scmp.lt.s32.totalorder %s8, 3
    %p129 = pnand %p127, %p128
    %p130 = pneg %p129
    // Predicated region
    $region25: #{tpu_custom_call.1} parent=5 // pred_check
      _
    $region26: #{tpu_custom_call.1} parent=5 // pred_check_branch
      %132 = sbr.rel (%p129) target = $region28
    $region27: #{tpu_custom_call.1} parent=5 // pred_region
      %s133 = ssub.s32 %s8, 1
      %p134 = scmp.lt.s32.totalorder %s17, 1
      %s135 = scalar_select %p134, %s17, 1
      %p136 = scmp.lt.s32.totalorder %s18, 0
      %s137 = scalar_select %p136, %s18, 0
      %s138 = sadd.s32 %s137, %s135
      %s139 = smul.addr %s138, 2
      %s140 = scalar_lea.vmem %s0, %s139
      %p141 = pneg %p48
      %p142 = pneg %p45
      %p143 = pneg %p69
      %p144 = pneg %p66
      %p145 = pneg %p95
      %p146 = pneg %p92
      %p147 = scmp.lt.s32.totalorder %s17, 1
      %s148 = scalar_select %p147, %s17, 1
      %s149 = smul.addr %s148, 2
      %s150 = smul.addr %s149, 8
      %s151 = scalar_lea.vmem %s2, %s150
      %p152 = scmp.lt.s32.totalorder %s17, 1
      %s153 = scalar_select %p152, %s17, 1
      %p154 = scmp.lt.s32.totalorder %s18, 0
      %s155 = scalar_select %p154, %s18, 0
      %s156 = sadd.s32 %s155, %s153
      %s157 = smul.addr %s156, 2
      %s158 = scalar_lea.vmem %s0, %s157
      %p159 = scmp.lt.s32.totalorder %s17, 1
      %s160 = scalar_select %p159, %s17, 1
      %s161 = smul.addr %s160, 2
      %s162 = smul.addr %s161, 8
      %s163 = scalar_lea.vmem %s2, %s162
      %p165 = scmp.eq.s32.totalorder %s18, 0
      // Predicated region
      $region29: #{tpu_custom_call.1} parent=27 // pred_check
        %p166 = pneg %p165
      $region30: #{tpu_custom_call.1} parent=27 // pred_check_branch
        %168 = sbr.rel (%p166) target = $region32
      $region31: #{tpu_custom_call.1} parent=27 // pred_region
        %vm169 = vcmask 7168
        %170 = vst.msk [vmem:[%s163] sm:$0xff] %vm169, 0.0
        %171 = vst.msk [vmem:[%s163 + $0x8] sm:$0xff] %vm169, 0.0
      $region32: #{tpu_custom_call.1} parent=27 // pred_fallthru
        _
      %v172 = vld [vmem:[%s1] sm:$0xf]
      %v173 = vld [vmem:[%s158] sm:$0x3]
      %vm174 = vcmask 31744
      %v176 = vsel %vm174, %v172, 0
      %vm178 = vcmask 1041408
      %v180 = vsel %vm178, %v173, 0
      %182 = vmatpush.bf16.msra.mxu0 0
      %183 = vmatpush.bf16.msra.mxu0 0
      %184 = vmatpush.bf16.msra.mxu0 0
      %185 = vmatpush.bf16.msra.mxu0 0
      %186 = vmatpush.bf16.msra.mxu0 0
      %187 = vmatpush.bf16.msra.mxu0 0
      %188 = vmatpush.bf16.msra.mxu0 0
      %189 = vmatpush.bf16.msra.mxu0 %v180
      %190 = vmatmul.bf16.gmra.mxu0 %v176
      %v191 = vpop.f32.mrf.mxu0
      %v192 = vadd.f32 0.0, %v191
      %v193 = vpop.f32.mrf.mxu0
      %194 = vdwg.mxu0
      %v195 = vld [vmem:[%s163] sm:$0xff]
      %196 = vadd.xlane.f32.xlu0 %v192
      %v197 = vpop.xlane.xlu0 %196
      %v198 = vadd.f32 %v195, %v197
      %vm199 = vcmask 7168
      %200 = vst.msk [vmem:[%s163] sm:$0xff] %vm199, %v198
      %s201 = scalar_lea.vmem %s163, 8
      %v202 = vld [vmem:[%s201] sm:$0xff]
      %v203 = vmul.f32 %v192, %v192
      %204 = vadd.xlane.f32.xlu0 %v203
      %v205 = vpop.xlane.xlu0 %204
      %v206 = vadd.f32 %v202, %v205
      %207 = vst.msk [vmem:[%s201] sm:$0xff] %vm199, %v206
      %p208 = scmp.lt.s32.totalorder %s17, 1
      %s209 = scalar_select %p208, %s17, 1
      %s210 = smul.addr %s209, 2
      %s211 = smul.addr %s210, 8
      %s212 = scalar_lea.vmem %s2, %s211
      // Predicated region
      $region33: #{tpu_custom_call.1} parent=27 // pred_check
        %p213 = pneg %p92
      $region34: #{tpu_custom_call.1} parent=27 // pred_check_branch
        %215 = sbr.rel (%p213) target = $region36
      $region35: #{tpu_custom_call.1} parent=27 // pred_region
        _
      $region36: #{tpu_custom_call.1} parent=27 // pred_fallthru
        _
    $region28: #{tpu_custom_call.1} parent=5 // pred_fallthru
      _
    %p216 = scmp.le.s32.totalorder 2, %s8
    // Predicated region
    $region37: #{tpu_custom_call.1} parent=5 // pred_check
      %p217 = pneg %p216
    $region38: #{tpu_custom_call.1} parent=5 // pred_check_branch
      %219 = sbr.rel (%p217) target = $region40
    $region39: #{tpu_custom_call.1} parent=5 // pred_region
      %s220 = ssub.s32 %s8, 2
      // Predicated region
      $region41: #{tpu_custom_call.1} parent=39 // pred_check
        %p221 = pneg %p98
      $region42: #{tpu_custom_call.1} parent=39 // pred_check_branch
        %223 = sbr.rel (%p221) target = $region44
      $region43: #{tpu_custom_call.1} parent=39 // pred_region
        %p224 = scmp.lt.s32.totalorder %s19, 1
        %s225 = scalar_select %p224, %s19, 1
        %s226 = smul.addr %s225, 2
        %s227 = smul.addr %s226, 8
        %s228 = scalar_lea.vmem %s2, %s227
      $region44: #{tpu_custom_call.1} parent=39 // pred_fallthru
        _
    $region40: #{tpu_custom_call.1} parent=5 // pred_fallthru
      _
  $region6: #{tpu_custom_call.1} parent=0 // loop_footer
    %s12 = sadd.s32 1, %s8
  $region7: #{tpu_custom_call.1} parent=0 // loop_footer_branch
    %7 = sbr.rel target = $region3
  $region8: #{tpu_custom_call.1} parent=0 // loop_exit
    _

</llo_original>
